<compile_context>
chip_gen: v7x
topology: tpu7x:2x2x1
jax: 0.10.0
libtpu: 0.0.40
codegen_flags: <defaults>
</compile_context>

<pallas_src>
import jax
import jax.numpy as jnp
from jax.experimental import pallas as pl
from jax.experimental.pallas import tpu as pltpu


# ----------------------------- configuration -------------------------------
B = 2            # batch
F0 = 32          # num_filters[0]
LATENT = 8       # latent_dim
NUM_CLASSES = 4  # num_classes
D, H, W = 4, 8, 8
S = D * H * W            # flattened spatial size per batch element (256)
BS = B * S               # lane axis of the collapsed slab (512 = 4 x 128)
NO_CONVS_FCOMB = 4
N_MID = NO_CONVS_FCOMB - 2   # middle F0->F0 convs (each followed by ReLU)

# Parameter-slab layout: rows 0:F0 = W1 (feature part); rows (i+1)*F0:(i+2)*F0 =
# mid conv i weights with its bias in column F0; last NUM_CLASSES weight rows +
# bias column for the final conv.  Lane-padded to 128 columns.
W_ROWS = (N_MID + 1) * F0 + NUM_CLASSES        # 100
SLAB_ROWS = ((W_ROWS + 7) // 8) * 8            # 104 (sublane aligned)
SLAB_COLS = 128                                # lane padded


# ------------------------------- kernel -------------------------------------
def fcomb_kernel(feat_ref, bias1_ref, params_ref, o_ref):
    # feat_ref:   (F0, B*S)   channels on sublanes, batch*space on lanes
    # bias1_ref:  (F0, B*S)   per-batch fused bias (W1z @ z + b1), pre-broadcast
    # params_ref: (SLAB_ROWS, 128) packed constant weights/biases
    # o_ref:      (NUM_CLASSES, B*S)
    x = feat_ref[...]                                                  # (F0, BS)

    # First 1x1x1 conv on concat(feature_map, tiled z):
    #   W1 @ concat(x, z) + b1 == W1f @ x + (W1z @ z + b1)  (latter precomputed)
    w1f = params_ref[0:F0, 0:F0]
    h = jnp.dot(w1f, x, preferred_element_type=jnp.float32)
    h = jnp.maximum(h + bias1_ref[...], 0.0)                           # ReLU

    # Middle 1x1x1 convs + ReLU (small static unroll, static slab slices)
    for i in range(N_MID):
        r0 = (i + 1) * F0
        w = params_ref[r0:r0 + F0, 0:F0]
        b = params_ref[r0:r0 + F0, F0:F0 + 1]
        h = jnp.maximum(jnp.dot(w, h, preferred_element_type=jnp.float32) + b, 0.0)

    # Last 1x1x1 conv to num_classes, then activation_layer (sigmoid)
    r0 = (N_MID + 1) * F0
    wlast = params_ref[r0:r0 + NUM_CLASSES, 0:F0]
    blast = params_ref[r0:r0 + NUM_CLASSES, F0:F0 + 1]
    out = jnp.dot(wlast, h, preferred_element_type=jnp.float32) + blast
    o_ref[...] = jax.nn.sigmoid(out)                                   # (NC, BS)


# --------------------------- parameter packing -------------------------------
def pack_param_slab(w1f, wmid, bmid, wlast, blast):
    """Pack all constant conv weights/biases into one lane-padded f32 slab."""
    slab = jnp.zeros((SLAB_ROWS, SLAB_COLS), jnp.float32)
    slab = slab.at[0:F0, 0:F0].set(w1f)
    for i in range(N_MID):
        r0 = (i + 1) * F0
        slab = slab.at[r0:r0 + F0, 0:F0].set(wmid[i])
        slab = slab.at[r0:r0 + F0, F0].set(bmid[i])
    r0 = (N_MID + 1) * F0
    slab = slab.at[r0:r0 + NUM_CLASSES, 0:F0].set(wlast)
    slab = slab.at[r0:r0 + NUM_CLASSES, F0].set(blast)
    return slab


# ------------------------------- wrapper -------------------------------------
@jax.jit
def fcomb_forward(feat_ncdhw, z, params):
    """feat_ncdhw: (B, F0, D, H, W), z: (B, L).  Returns (B, NUM_CLASSES, D, H, W)."""
    w1f, w1z, b1, wmid, bmid, wlast, blast = params

    b, f0, d, h, w = feat_ncdhw.shape
    s = d * h * w
    bs = b * s

    # (B, F0, S) -> (F0, B*S): collapse batch into the lane axis (tiny XLA
    # transpose of 64 KiB; lets the kernel run as one grid step).
    feat = jnp.transpose(feat_ncdhw.reshape(b, f0, s), (1, 0, 2)).reshape(f0, bs)

    # Fold latent contribution of conv1 into a per-batch bias, pre-broadcast so
    # each batch's 256-lane half of the slab gets its own bias.
    bias1 = (z @ w1z.T + b1)                                        # (B, F0)
    bias1 = jnp.broadcast_to(bias1.T[:, :, None], (f0, b, s)).reshape(f0, bs)

    # Single packed constant-parameter slab (1 DMA instead of 5).
    slab = pack_param_slab(w1f, wmid, bmid, wlast, blast)           # (104, 128)

    flops = 2 * bs * f0 * ((N_MID + 1) * f0 + NUM_CLASSES)
    bytes_accessed = 4 * (feat.size + bias1.size + slab.size + NUM_CLASSES * bs)

    out = pl.pallas_call(
        fcomb_kernel,
        out_shape=jax.ShapeDtypeStruct((NUM_CLASSES, bs), jnp.float32),
        grid_spec=pltpu.PrefetchScalarGridSpec(
            num_scalar_prefetch=0,
            grid=(1,),                                   # single collapsed step
            in_specs=[
                pl.BlockSpec((f0, bs), lambda i: (0, 0)),            # feature slab
                pl.BlockSpec((f0, bs), lambda i: (0, 0)),            # fused bias1
                pl.BlockSpec((SLAB_ROWS, SLAB_COLS), lambda i: (0, 0)),  # params
            ],
            out_specs=pl.BlockSpec((NUM_CLASSES, bs), lambda i: (0, 0)),
        ),
        compiler_params=pltpu.CompilerParams(
            dimension_semantics=("arbitrary",)),
        cost_estimate=pl.CostEstimate(
            flops=flops,
            transcendentals=NUM_CLASSES * bs,            # sigmoid exp
            bytes_accessed=bytes_accessed),
    )(feat, bias1, slab)

    # (NUM_CLASSES, B*S) -> (B, NUM_CLASSES, D, H, W) (small XLA transpose).
    return jnp.transpose(out.reshape(NUM_CLASSES, b, s), (1, 0, 2)).reshape(
        b, NUM_CLASSES, d, h, w)


# --------------------------- deterministic params ----------------------------
def make_params(key):
    # 1x1x1 Conv3d weights in PyTorch (out_ch, in_ch) orientation (kernel dims squeezed).
    ks = jax.random.split(key, 7)
    w1f = 0.1 * jax.random.normal(ks[0], (F0, F0), jnp.float32)          # conv1, feature part
    w1z = 0.1 * jax.random.normal(ks[1], (F0, LATENT), jnp.float32)      # conv1, latent part
    b1 = 0.1 * jax.random.normal(ks[2], (F0,), jnp.float32)
    wmid = 0.1 * jax.random.normal(ks[3], (N_MID, F0, F0), jnp.float32)
    bmid = 0.1 * jax.random.normal(ks[4], (N_MID, F0), jnp.float32)
    wlast = 0.1 * jax.random.normal(ks[5], (NUM_CLASSES, F0), jnp.float32)
    blast = 0.1 * jax.random.normal(ks[6], (NUM_CLASSES,), jnp.float32)
    return (w1f, w1z, b1, wmid, bmid, wlast, blast)


# ------------------------------ JAX reference --------------------------------
def ref_forward(feat_ncdhw, z, params):
    w1f, w1z, b1, wmid, bmid, wlast, blast = params
    b, f0, d, h, w = feat_ncdhw.shape
    # tile z over spatial dims and concat on channel axis (matches torch path)
    zt = jnp.broadcast_to(z[:, :, None, None, None], (b, LATENT, d, h, w))
    x = jnp.concatenate([feat_ncdhw, zt], axis=1)                 # (B, F0+L, D, H, W)
    x = jnp.transpose(x, (0, 2, 3, 4, 1)).reshape(-1, f0 + LATENT)
    w1 = jnp.concatenate([w1f, w1z], axis=1)                      # (F0, F0+L)
    hh = jax.nn.relu(x @ w1.T + b1)
    for i in range(N_MID):
        hh = jax.nn.relu(hh @ wmid[i].T + bmid[i])
    out = jax.nn.sigmoid(hh @ wlast.T + blast)
    return jnp.transpose(out.reshape(b, d, h, w, NUM_CLASSES), (0, 4, 1, 2, 3))


# ---------------------------------- main --------------------------------------
if __name__ == "__main__":
    key = jax.random.PRNGKey(0)
    k_feat, k_z, k_params = jax.random.split(key, 3)

    feature_map = jax.random.normal(k_feat, (B, F0, D, H, W), jnp.float32)
    z = jax.random.normal(k_z, (B, LATENT), jnp.float32)
    params = make_params(k_params)

    # TODO(synk): only the use_tile=True / norm=False path is implemented; the
    # GatedConvTranspose2d latent_broadcast branch and BatchNorm3d are omitted.
    out = fcomb_forward(feature_map, z, params)
    out = jax.block_until_ready(out)

    ref = jax.block_until_ready(ref_forward(feature_map, z, params))
    assert out.shape == (B, NUM_CLASSES, D, H, W)
    assert jnp.allclose(out, ref, rtol=1e-5, atol=1e-5), "mismatch vs reference"

    print("KERNEL_OK")
</pallas_src>

<mosaic_0001>
module attributes {stable_mosaic.version = 11 : i64} {
  func.func @fcomb_kernel(%arg0: i32, %arg1: memref<32x512xf32, #tpu.memory_space<vmem>>, %arg2: memref<32x512xf32, #tpu.memory_space<vmem>>, %arg3: memref<104x128xf32, #tpu.memory_space<vmem>>, %arg4: memref<4x512xf32, #tpu.memory_space<vmem>>) attributes {dimension_semantics = [#tpu.dimension_semantics<arbitrary>], iteration_bounds = array<i64: 1>, scalar_prefetch = 0 : i64, scratch_operands = 0 : i64, tpu.core_type = #tpu.core_type<tc>, window_params = [{pipeline_mode = #tpu.pipeline_mode<synchronous>, transform_indices = @transform_0, window_bounds = array<i64: 32, 512>}, {pipeline_mode = #tpu.pipeline_mode<synchronous>, transform_indices = @transform_1, window_bounds = array<i64: 32, 512>}, {pipeline_mode = #tpu.pipeline_mode<synchronous>, transform_indices = @transform_2, window_bounds = array<i64: 104, 128>}, {pipeline_mode = #tpu.pipeline_mode<synchronous>, transform_indices = @transform_3, window_bounds = array<i64: 4, 512>}]} {
    %c0 = arith.constant 0 : index
    %c0_0 = arith.constant 0 : index
    %0 = vector.load %arg1[%c0, %c0_0] : memref<32x512xf32, #tpu.memory_space<vmem>>, vector<32x512xf32>
    %c0_1 = arith.constant 0 : index
    %c0_2 = arith.constant 0 : index
    %1 = vector.load %arg3[%c0_1, %c0_2] : memref<104x128xf32, #tpu.memory_space<vmem>>, vector<32x32xf32>
    %cst = arith.constant dense<0.000000e+00> : vector<32x512xf32>
    %2 = tpu.matmul %1, %0, %cst {dimension_numbers = #tpu.dot_dimension_numbers<[1], [0], [0], [1], [0, 0, 1, 1], [], []>} : vector<32x32xf32>, vector<32x512xf32>, vector<32x512xf32> -> vector<32x512xf32>
    %c0_3 = arith.constant 0 : index
    %c0_4 = arith.constant 0 : index
    %3 = vector.load %arg2[%c0_3, %c0_4] : memref<32x512xf32, #tpu.memory_space<vmem>>, vector<32x512xf32>
    %4 = arith.addf %2, %3 : vector<32x512xf32>
    %cst_5 = arith.constant 0.000000e+00 : f32
    %5 = vector.broadcast %cst_5 : f32 to vector<32x512xf32>
    %6 = arith.maximumf %4, %5 : vector<32x512xf32>
    %c32 = arith.constant 32 : index
    %c0_6 = arith.constant 0 : index
    %7 = vector.load %arg3[%c32, %c0_6] : memref<104x128xf32, #tpu.memory_space<vmem>>, vector<32x32xf32>
    %c32_7 = arith.constant 32 : index
    %c32_8 = arith.constant 32 : index
    %8 = vector.load %arg3[%c32_7, %c32_8] : memref<104x128xf32, #tpu.memory_space<vmem>>, vector<32x1xf32>
    %cst_9 = arith.constant dense<0.000000e+00> : vector<32x512xf32>
    %9 = tpu.matmul %7, %6, %cst_9 {dimension_numbers = #tpu.dot_dimension_numbers<[1], [0], [0], [1], [0, 0, 1, 1], [], []>} : vector<32x32xf32>, vector<32x512xf32>, vector<32x512xf32> -> vector<32x512xf32>
    %10 = vector.broadcast %8 : vector<32x1xf32> to vector<32x512xf32>
    %11 = arith.addf %9, %10 : vector<32x512xf32>
    %cst_10 = arith.constant 0.000000e+00 : f32
    %12 = vector.broadcast %cst_10 : f32 to vector<32x512xf32>
    %13 = arith.maximumf %11, %12 : vector<32x512xf32>
    %c64 = arith.constant 64 : index
    %c0_11 = arith.constant 0 : index
    %14 = vector.load %arg3[%c64, %c0_11] : memref<104x128xf32, #tpu.memory_space<vmem>>, vector<32x32xf32>
    %c64_12 = arith.constant 64 : index
    %c32_13 = arith.constant 32 : index
    %15 = vector.load %arg3[%c64_12, %c32_13] : memref<104x128xf32, #tpu.memory_space<vmem>>, vector<32x1xf32>
    %cst_14 = arith.constant dense<0.000000e+00> : vector<32x512xf32>
    %16 = tpu.matmul %14, %13, %cst_14 {dimension_numbers = #tpu.dot_dimension_numbers<[1], [0], [0], [1], [0, 0, 1, 1], [], []>} : vector<32x32xf32>, vector<32x512xf32>, vector<32x512xf32> -> vector<32x512xf32>
    %17 = vector.broadcast %15 : vector<32x1xf32> to vector<32x512xf32>
    %18 = arith.addf %16, %17 : vector<32x512xf32>
    %cst_15 = arith.constant 0.000000e+00 : f32
    %19 = vector.broadcast %cst_15 : f32 to vector<32x512xf32>
    %20 = arith.maximumf %18, %19 : vector<32x512xf32>
    %c96 = arith.constant 96 : index
    %c0_16 = arith.constant 0 : index
    %21 = vector.load %arg3[%c96, %c0_16] : memref<104x128xf32, #tpu.memory_space<vmem>>, vector<4x32xf32>
    %c96_17 = arith.constant 96 : index
    %c32_18 = arith.constant 32 : index
    %22 = vector.load %arg3[%c96_17, %c32_18] : memref<104x128xf32, #tpu.memory_space<vmem>>, vector<4x1xf32>
    %cst_19 = arith.constant dense<0.000000e+00> : vector<4x512xf32>
    %23 = tpu.matmul %21, %20, %cst_19 {dimension_numbers = #tpu.dot_dimension_numbers<[1], [0], [0], [1], [0, 0, 1, 1], [], []>} : vector<4x32xf32>, vector<32x512xf32>, vector<4x512xf32> -> vector<4x512xf32>
    %24 = vector.broadcast %22 : vector<4x1xf32> to vector<4x512xf32>
    %25 = arith.addf %23, %24 : vector<4x512xf32>
    %26 = arith.negf %25 : vector<4x512xf32>
    %27 = math.exp %26 : vector<4x512xf32>
    %cst_20 = arith.constant 1.000000e+00 : f32
    %28 = vector.broadcast %cst_20 : f32 to vector<4x512xf32>
    %29 = arith.addf %28, %27 : vector<4x512xf32>
    %30 = arith.divf %28, %29 : vector<4x512xf32>
    %c0_21 = arith.constant 0 : index
    %c0_22 = arith.constant 0 : index
    %31 = vector.load %arg4[%c0_21, %c0_22] : memref<4x512xf32, #tpu.memory_space<vmem>>, vector<4x512xf32>
    tpu.vector_store %arg4[%c0_21, %c0_22], %30 {strides = array<i32>} : memref<4x512xf32, #tpu.memory_space<vmem>>, vector<4x512xf32>,
    return
  }
  func.func @transform_0(%arg0: i32) -> (i32, i32) {
    %c0_i32 = arith.constant 0 : i32
    %c0_i32_0 = arith.constant 0 : i32
    %c0_i32_1 = arith.constant 0 : i32
    return %c0_i32, %c0_i32_0 : i32, i32
  }
  func.func @transform_1(%arg0: i32) -> (i32, i32) {
    %c0_i32 = arith.constant 0 : i32
    %c0_i32_0 = arith.constant 0 : i32
    %c0_i32_1 = arith.constant 0 : i32
    return %c0_i32, %c0_i32_0 : i32, i32
  }
  func.func @transform_2(%arg0: i32) -> (i32, i32) {
    %c0_i32 = arith.constant 0 : i32
    %c0_i32_0 = arith.constant 0 : i32
    %c0_i32_1 = arith.constant 0 : i32
    return %c0_i32, %c0_i32_0 : i32, i32
  }
  func.func @transform_3(%arg0: i32) -> (i32, i32) {
    %c0_i32 = arith.constant 0 : i32
    %c0_i32_0 = arith.constant 0 : i32
    %c0_i32_1 = arith.constant 0 : i32
    return %c0_i32, %c0_i32_0 : i32, i32
  }
}

</mosaic_0001>

<llo_original>
// kernel: fcomb_forward.1
$region0: #{fcomb_forward.1}
  #allocation0 [shape = 'u32[]', space=smem, size = 0x4, offset = 0x4, fixed_abs, tag = 'smem constant byte address 0x4 - core index']
  #allocation1 [shape = 'u32[144,128]{1,0:T(1,128)}', space=vmem, size = 0x12000, scoped, tag = 'internal scratch']
  %s0 = inlined_call_operand.vmem [shape: f32[32,512], index: 0, kind: input, shape index: {}]
  %s1 = inlined_call_operand.vmem [shape: f32[32,512], index: 1, kind: input, shape index: {}]
  %s2 = inlined_call_operand.vmem [shape: f32[104,128], index: 2, kind: input, shape index: {}]
  %s3 = inlined_call_operand.vmem [shape: f32[4,512], index: 3, kind: output, shape index: {}]
  %s4 = sld [smem:[#allocation0]]
  $region22: #{fcomb_forward.1} parent=0
    _
  %s6 = ssub.s32 1, %s4
  %s7 = scalar_select 0, %s6, %s4
  // Predicated region
  $region2: #{fcomb_forward.1} parent=0 // pred_check
    _
  $region3: #{fcomb_forward.1} parent=0 // pred_check_branch
    %9 = sbr.rel (0) target = $region5
  $region4: #{fcomb_forward.1} parent=0 // pred_region
    _
  $region5: #{fcomb_forward.1} parent=0 // pred_fallthru
    _
  // Predicated region
  $region6: #{fcomb_forward.1} parent=0 // pred_check
    _
  $region7: #{fcomb_forward.1} parent=0 // pred_check_branch
    %11 = sbr.rel (0) target = $region9
  $region8: #{fcomb_forward.1} parent=0 // pred_region
    _
  $region9: #{fcomb_forward.1} parent=0 // pred_fallthru
    _
  // Predicated region
  $region10: #{fcomb_forward.1} parent=0 // pred_check
    _
  $region11: #{fcomb_forward.1} parent=0 // pred_check_branch
    %13 = sbr.rel (0) target = $region13
  $region12: #{fcomb_forward.1} parent=0 // pred_region
    _
  $region13: #{fcomb_forward.1} parent=0 // pred_fallthru
    _
  %v14 = vld [vmem:[%s0] sm:$0xff]
  %v15 = vld [vmem:[%s0 + $0x8] sm:$0xff]
  %v16 = vld [vmem:[%s0 + $0x10] sm:$0xff]
  %v17 = vld [vmem:[%s0 + $0x18] sm:$0xff]
  %v18 = vld [vmem:[%s0 + $0x20] sm:$0xff]
  %v19 = vld [vmem:[%s0 + $0x28] sm:$0xff]
  %v20 = vld [vmem:[%s0 + $0x30] sm:$0xff]
  %v21 = vld [vmem:[%s0 + $0x38] sm:$0xff]
  %v22 = vld [vmem:[%s0 + $0x40] sm:$0xff]
  %v23 = vld [vmem:[%s0 + $0x48] sm:$0xff]
  %v24 = vld [vmem:[%s0 + $0x50] sm:$0xff]
  %v25 = vld [vmem:[%s0 + $0x58] sm:$0xff]
  %v26 = vld [vmem:[%s0 + $0x60] sm:$0xff]
  %v27 = vld [vmem:[%s0 + $0x68] sm:$0xff]
  %v28 = vld [vmem:[%s0 + $0x70] sm:$0xff]
  %v29 = vld [vmem:[%s0 + $0x78] sm:$0xff]
  %v30 = vld [vmem:[%s2] sm:$0xff]
  %v31 = vld [vmem:[%s2 + $0x8] sm:$0xff]
  %v32 = vld [vmem:[%s2 + $0x10] sm:$0xff]
  %v33 = vld [vmem:[%s2 + $0x18] sm:$0xff]
  %v34 = vld [vmem:[%s1] sm:$0xff]
  %v35 = vld [vmem:[%s1 + $0x8] sm:$0xff]
  %v36 = vld [vmem:[%s1 + $0x10] sm:$0xff]
  %v37 = vld [vmem:[%s1 + $0x18] sm:$0xff]
  %v38 = vld [vmem:[%s1 + $0x20] sm:$0xff]
  %v39 = vld [vmem:[%s1 + $0x28] sm:$0xff]
  %v40 = vld [vmem:[%s1 + $0x30] sm:$0xff]
  %v41 = vld [vmem:[%s1 + $0x38] sm:$0xff]
  %v42 = vld [vmem:[%s1 + $0x40] sm:$0xff]
  %v43 = vld [vmem:[%s1 + $0x48] sm:$0xff]
  %v44 = vld [vmem:[%s1 + $0x50] sm:$0xff]
  %v45 = vld [vmem:[%s1 + $0x58] sm:$0xff]
  %v46 = vld [vmem:[%s1 + $0x60] sm:$0xff]
  %v47 = vld [vmem:[%s1 + $0x68] sm:$0xff]
  %v48 = vld [vmem:[%s1 + $0x70] sm:$0xff]
  %v49 = vld [vmem:[%s1 + $0x78] sm:$0xff]
  %vm50 = vcmask 261120
  %v52 = vsel %vm50, %v30, 0
  %v55 = vsel %vm50, %v31, 0
  %v58 = vsel %vm50, %v32, 0
  %v61 = vsel %vm50, %v33, 0
  %63 = vmatprep.subr.mxu0 %v15
  %64 = vmatpush1.msra.mxu0 %v14
  %65 = vmatprep.subr.mxu0 %v19
  %66 = vmatpush1.msra.mxu0 %v18
  %67 = vmatprep.subr.mxu0 %v23
  %68 = vmatpush1.msra.mxu0 %v22
  %69 = vmatprep.subr.mxu0 %v27
  %70 = vmatpush1.msra.mxu0 %v26
  %71 = vmatprep.subr.mxu0 0.0
  %72 = vmatpush1.msra.mxu0 0.0
  %73 = vmatprep.subr.mxu0 0.0
  %74 = vmatpush1.msra.mxu0 0.0
  %75 = vmatprep.subr.mxu0 0.0
  %76 = vmatpush1.msra.mxu0 0.0
  %77 = vmatprep.subr.mxu0 0.0
  %78 = vmatpush1.msra.mxu0 0.0
  %79 = vmatprep.subr.mxu0 0.0
  %80 = vmatpush1.msra.mxu0 0.0
  %81 = vmatprep.subr.mxu0 0.0
  %82 = vmatpush1.msra.mxu0 0.0
  %83 = vmatprep.subr.mxu0 0.0
  %84 = vmatpush1.msra.mxu0 0.0
  %85 = vmatprep.subr.mxu0 0.0
  %86 = vmatpush1.msra.mxu0 0.0
  %87 = vmatprep.subr.mxu0 0.0
  %88 = vmatpush1.msra.mxu0 0.0
  %89 = vmatprep.subr.mxu0 0.0
  %90 = vmatpush1.msra.mxu0 0.0
  %91 = vmatprep.subr.mxu0 0.0
  %92 = vmatpush1.msra.mxu0 0.0
  %93 = vmatprep.subr.mxu0 0.0
  %94 = vmatpush1.msra.mxu0 0.0
  %95 = vmatprep.subr.mxu0 0.0
  %96 = vmatpush1.msra.mxu0 0.0
  %97 = vmatprep.subr.mxu0 0.0
  %98 = vmatpush1.msra.mxu0 0.0
  %99 = vmatprep.subr.mxu0 0.0
  %100 = vmatpush1.msra.mxu0 0.0
  %101 = vmatprep.subr.mxu0 0.0
  %102 = vmatpush1.msra.mxu0 0.0
  %103 = vmatprep.subr.mxu0 0.0
  %104 = vmatpush1.msra.mxu0 0.0
  %105 = vmatprep.subr.mxu0 0.0
  %106 = vmatpush1.msra.mxu0 0.0
  %107 = vmatprep.subr.mxu0 0.0
  %108 = vmatpush1.msra.mxu0 0.0
  %109 = vmatprep.subr.mxu0 0.0
  %110 = vmatpush1.msra.mxu0 0.0
  %111 = vmatprep.subr.mxu0 0.0
  %112 = vmatpush1.msra.mxu0 0.0
  %113 = vmatprep.subr.mxu0 0.0
  %114 = vmatpush1.msra.mxu0 0.0
  %115 = vmatprep.subr.mxu0 0.0
  %116 = vmatpush1.msra.mxu0 0.0
  %117 = vmatprep.subr.mxu0 0.0
  %118 = vmatpush1.msra.mxu0 0.0
  %119 = vmatprep.subr.mxu0 0.0
  %120 = vmatpush1.msra.mxu0 0.0
  %121 = vmatprep.subr.mxu0 0.0
  %122 = vmatpush1.msra.mxu0 0.0
  %123 = vmatprep.subr.mxu0 0.0
  %124 = vmatpush1.msra.mxu0 0.0
  %125 = vmatprep.subr.mxu0 0.0
  %126 = vmatpush1.msra.mxu0 0.0
  %127 = vmatprep.mubr.f32.mxu0 0.0
  %128 = vmatmul.mubr.f32.gmra.mrb[0].mxu0 %v52
  %v129 = vpop.f32.mrb[0].mxu0
  %v130 = vadd.f32 %v34, %v129
  %v131 = vpop.f32.mrb[0].mxu0
  %v132 = vadd.f32 %v35, %v131
  %133 = vmatprep.mubr.f32.mxu0 0.0
  %134 = vmatmul.mubr.f32.gmra.mrb[0].mxu0 %v55
  %v135 = vpop.f32.mrb[0].mxu0
  %v136 = vadd.f32 %v38, %v135
  %v137 = vpop.f32.mrb[0].mxu0
  %v138 = vadd.f32 %v39, %v137
  %139 = vmatprep.mubr.f32.mxu0 0.0
  %140 = vmatmul.mubr.f32.gmra.mrb[0].mxu0 %v58
  %v141 = vpop.f32.mrb[0].mxu0
  %v142 = vadd.f32 %v42, %v141
  %v143 = vpop.f32.mrb[0].mxu0
  %v144 = vadd.f32 %v43, %v143
  %145 = vmatprep.mubr.f32.mxu0 0.0
  %146 = vmatmul.mubr.f32.gmra.mrb[0].mxu0 %v61
  %v147 = vpop.f32.mrb[0].mxu0
  %v148 = vadd.f32 %v46, %v147
  %v149 = vpop.f32.mrb[0].mxu0
  %v150 = vadd.f32 %v47, %v149
  %151 = vdwg.mxu0
  %152 = vmatprep.subr.mxu0 %v17
  %153 = vmatpush1.msra.mxu0 %v16
  %154 = vmatprep.subr.mxu0 %v21
  %155 = vmatpush1.msra.mxu0 %v20
  %156 = vmatprep.subr.mxu0 %v25
  %157 = vmatpush1.msra.mxu0 %v24
  %158 = vmatprep.subr.mxu0 %v29
  %159 = vmatpush1.msra.mxu0 %v28
  %160 = vmatprep.subr.mxu0 0.0
  %161 = vmatpush1.msra.mxu0 0.0
  %162 = vmatprep.subr.mxu0 0.0
  %163 = vmatpush1.msra.mxu0 0.0
  %164 = vmatprep.subr.mxu0 0.0
  %165 = vmatpush1.msra.mxu0 0.0
  %166 = vmatprep.subr.mxu0 0.0
  %167 = vmatpush1.msra.mxu0 0.0
  %168 = vmatprep.subr.mxu0 0.0
  %169 = vmatpush1.msra.mxu0 0.0
  %170 = vmatprep.subr.mxu0 0.0
  %171 = vmatpush1.msra.mxu0 0.0
  %172 = vmatprep.subr.mxu0 0.0
  %173 = vmatpush1.msra.mxu0 0.0
  %174 = vmatprep.subr.mxu0 0.0
  %175 = vmatpush1.msra.mxu0 0.0
  %176 = vmatprep.subr.mxu0 0.0
  %177 = vmatpush1.msra.mxu0 0.0
  %178 = vmatprep.subr.mxu0 0.0
  %179 = vmatpush1.msra.mxu0 0.0
  %180 = vmatprep.subr.mxu0 0.0
  %181 = vmatpush1.msra.mxu0 0.0
  %182 = vmatprep.subr.mxu0 0.0
  %183 = vmatpush1.msra.mxu0 0.0
  %184 = vmatprep.subr.mxu0 0.0
  %185 = vmatpush1.msra.mxu0 0.0
  %186 = vmatprep.subr.mxu0 0.0
  %187 = vmatpush1.msra.mxu0 0.0
  %188 = vmatprep.subr.mxu0 0.0
  %189 = vmatpush1.msra.mxu0 0.0
  %190 = vmatprep.subr.mxu0 0.0
  %191 = vmatpush1.msra.mxu0 0.0
  %192 = vmatprep.subr.mxu0 0.0
  %193 = vmatpush1.msra.mxu0 0.0
  %194 = vmatprep.subr.mxu0 0.0
  %195 = vmatpush1.msra.mxu0 0.0
  %196 = vmatprep.subr.mxu0 0.0
  %197 = vmatpush1.msra.mxu0 0.0
  %198 = vmatprep.subr.mxu0 0.0
  %199 = vmatpush1.msra.mxu0 0.0
  %200 = vmatprep.subr.mxu0 0.0
  %201 = vmatpush1.msra.mxu0 0.0
  %202 = vmatprep.subr.mxu0 0.0
  %203 = vmatpush1.msra.mxu0 0.0
  %204 = vmatprep.subr.mxu0 0.0
  %205 = vmatpush1.msra.mxu0 0.0
  %206 = vmatprep.subr.mxu0 0.0
  %207 = vmatpush1.msra.mxu0 0.0
  %208 = vmatprep.subr.mxu0 0.0
  %209 = vmatpush1.msra.mxu0 0.0
  %210 = vmatprep.subr.mxu0 0.0
  %211 = vmatpush1.msra.mxu0 0.0
  %212 = vmatprep.subr.mxu0 0.0
  %213 = vmatpush1.msra.mxu0 0.0
  %214 = vmatprep.subr.mxu0 0.0
  %215 = vmatpush1.msra.mxu0 0.0
  %216 = vmatprep.mubr.f32.mxu0 0.0
  %217 = vmatmul.mubr.f32.gmra.mrb[0].mxu0 %v52
  %v218 = vpop.f32.mrb[0].mxu0
  %v219 = vadd.f32 %v36, %v218
  %v220 = vpop.f32.mrb[0].mxu0
  %v221 = vadd.f32 %v37, %v220
  %222 = vmatprep.mubr.f32.mxu0 0.0
  %223 = vmatmul.mubr.f32.gmra.mrb[0].mxu0 %v55
  %v224 = vpop.f32.mrb[0].mxu0
  %v225 = vadd.f32 %v40, %v224
  %v226 = vpop.f32.mrb[0].mxu0
  %v227 = vadd.f32 %v41, %v226
  %228 = vmatprep.mubr.f32.mxu0 0.0
  %229 = vmatmul.mubr.f32.gmra.mrb[0].mxu0 %v58
  %v230 = vpop.f32.mrb[0].mxu0
  %v231 = vadd.f32 %v44, %v230
  %v232 = vpop.f32.mrb[0].mxu0
  %v233 = vadd.f32 %v45, %v232
  %234 = vmatprep.mubr.f32.mxu0 0.0
  %235 = vmatmul.mubr.f32.gmra.mrb[0].mxu0 %v61
  %v236 = vpop.f32.mrb[0].mxu0
  %v237 = vadd.f32 %v48, %v236
  %v238 = vpop.f32.mrb[0].mxu0
  %v239 = vadd.f32 %v49, %v238
  %240 = vdwg.mxu0
  %v241 = vmax.f32 %v130, 0.0
  %v242 = vmax.f32 %v132, 0.0
  %v243 = vmax.f32 %v219, 0.0
  %v244 = vmax.f32 %v221, 0.0
  %v245 = vmax.f32 %v136, 0.0
  %v246 = vmax.f32 %v138, 0.0
  %v247 = vmax.f32 %v225, 0.0
  %v248 = vmax.f32 %v227, 0.0
  %v249 = vmax.f32 %v142, 0.0
  %v250 = vmax.f32 %v144, 0.0
  %v251 = vmax.f32 %v231, 0.0
  %v252 = vmax.f32 %v233, 0.0
  %v253 = vmax.f32 %v148, 0.0
  %v254 = vmax.f32 %v150, 0.0
  %v255 = vmax.f32 %v237, 0.0
  %v256 = vmax.f32 %v239, 0.0
  %v257 = vld [vmem:[%s2 + $0x20] sm:$0xff]
  %v258 = vld [vmem:[%s2 + $0x28] sm:$0xff]
  %v259 = vld [vmem:[%s2 + $0x30] sm:$0xff]
  %v260 = vld [vmem:[%s2 + $0x38] sm:$0xff]
  %262 = vset.pattern.permute.xlu0 32
  %263 = vperm.xlu0 %262, %v257
  %v264 = vpop.permute.xlu0 %263
  %267 = vset.pattern.permute.xlu0 32
  %268 = vperm.xlu0 %267, %v258
  %v269 = vpop.permute.xlu0 %268
  %272 = vset.pattern.permute.xlu0 32
  %273 = vperm.xlu0 %272, %v259
  %v274 = vpop.permute.xlu0 %273
  %277 = vset.pattern.permute.xlu0 32
  %278 = vperm.xlu0 %277, %v260
  %v279 = vpop.permute.xlu0 %278
  %v281 = vsel %vm50, %v257, 0
  %v283 = vsel %vm50, %v258, 0
  %v285 = vsel %vm50, %v259, 0
  %v287 = vsel %vm50, %v260, 0
  %289 = vmatprep.subr.mxu0 %v242
  %290 = vmatpush1.msra.mxu0 %v241
  %291 = vmatprep.subr.mxu0 %v246
  %292 = vmatpush1.msra.mxu0 %v245
  %293 = vmatprep.subr.mxu0 %v250
  %294 = vmatpush1.msra.mxu0 %v249
  %295 = vmatprep.subr.mxu0 %v254
  %296 = vmatpush1.msra.mxu0 %v253
  %297 = vmatprep.subr.mxu0 0.0
  %298 = vmatpush1.msra.mxu0 0.0
  %299 = vmatprep.subr.mxu0 0.0
  %300 = vmatpush1.msra.mxu0 0.0
  %301 = vmatprep.subr.mxu0 0.0
  %302 = vmatpush1.msra.mxu0 0.0
  %303 = vmatprep.subr.mxu0 0.0
  %304 = vmatpush1.msra.mxu0 0.0
  %305 = vmatprep.subr.mxu0 0.0
  %306 = vmatpush1.msra.mxu0 0.0
  %307 = vmatprep.subr.mxu0 0.0
  %308 = vmatpush1.msra.mxu0 0.0
  %309 = vmatprep.subr.mxu0 0.0
  %310 = vmatpush1.msra.mxu0 0.0
  %311 = vmatprep.subr.mxu0 0.0
  %312 = vmatpush1.msra.mxu0 0.0
  %313 = vmatprep.subr.mxu0 0.0
  %314 = vmatpush1.msra.mxu0 0.0
  %315 = vmatprep.subr.mxu0 0.0
  %316 = vmatpush1.msra.mxu0 0.0
  %317 = vmatprep.subr.mxu0 0.0
  %318 = vmatpush1.msra.mxu0 0.0
  %319 = vmatprep.subr.mxu0 0.0
  %320 = vmatpush1.msra.mxu0 0.0
  %321 = vmatprep.subr.mxu0 0.0
  %322 = vmatpush1.msra.mxu0 0.0
  %323 = vmatprep.subr.mxu0 0.0
  %324 = vmatpush1.msra.mxu0 0.0
  %325 = vmatprep.subr.mxu0 0.0
  %326 = vmatpush1.msra.mxu0 0.0
  %327 = vmatprep.subr.mxu0 0.0
  %328 = vmatpush1.msra.mxu0 0.0
  %329 = vmatprep.subr.mxu0 0.0
  %330 = vmatpush1.msra.mxu0 0.0
  %331 = vmatprep.subr.mxu0 0.0
  %332 = vmatpush1.msra.mxu0 0.0
  %333 = vmatprep.subr.mxu0 0.0
  %334 = vmatpush1.msra.mxu0 0.0
  %335 = vmatprep.subr.mxu0 0.0
  %336 = vmatpush1.msra.mxu0 0.0
  %337 = vmatprep.subr.mxu0 0.0
  %338 = vmatpush1.msra.mxu0 0.0
  %339 = vmatprep.subr.mxu0 0.0
  %340 = vmatpush1.msra.mxu0 0.0
  %341 = vmatprep.subr.mxu0 0.0
  %342 = vmatpush1.msra.mxu0 0.0
  %343 = vmatprep.subr.mxu0 0.0
  %344 = vmatpush1.msra.mxu0 0.0
  %345 = vmatprep.subr.mxu0 0.0
  %346 = vmatpush1.msra.mxu0 0.0
  %347 = vmatprep.subr.mxu0 0.0
  %348 = vmatpush1.msra.mxu0 0.0
  %349 = vmatprep.subr.mxu0 0.0
  %350 = vmatpush1.msra.mxu0 0.0
  %351 = vmatprep.subr.mxu0 0.0
  %352 = vmatpush1.msra.mxu0 0.0
  %353 = vmatprep.mubr.f32.mxu0 0.0
  %354 = vmatmul.mubr.f32.gmra.mrb[0].mxu0 %v281
  %v355 = vpop.f32.mrb[0].mxu0
  %v356 = vadd.f32 %v264, %v355
  %v357 = vpop.f32.mrb[0].mxu0
  %v358 = vadd.f32 %v264, %v357
  %359 = vmatprep.mubr.f32.mxu0 0.0
  %360 = vmatmul.mubr.f32.gmra.mrb[0].mxu0 %v283
  %v361 = vpop.f32.mrb[0].mxu0
  %v362 = vadd.f32 %v269, %v361
  %v363 = vpop.f32.mrb[0].mxu0
  %v364 = vadd.f32 %v269, %v363
  %365 = vmatprep.mubr.f32.mxu0 0.0
  %366 = vmatmul.mubr.f32.gmra.mrb[0].mxu0 %v285
  %v367 = vpop.f32.mrb[0].mxu0
  %v368 = vadd.f32 %v274, %v367
  %v369 = vpop.f32.mrb[0].mxu0
  %v370 = vadd.f32 %v274, %v369
  %371 = vmatprep.mubr.f32.mxu0 0.0
  %372 = vmatmul.mubr.f32.gmra.mrb[0].mxu0 %v287
  %v373 = vpop.f32.mrb[0].mxu0
  %v374 = vadd.f32 %v279, %v373
  %v375 = vpop.f32.mrb[0].mxu0
  %v376 = vadd.f32 %v279, %v375
  %377 = vdwg.mxu0
  %378 = vmatprep.subr.mxu0 %v244
  %379 = vmatpush1.msra.mxu0 %v243
  %380 = vmatprep.subr.mxu0 %v248
  %381 = vmatpush1.msra.mxu0 %v247
  %382 = vmatprep.subr.mxu0 %v252
  %383 = vmatpush1.msra.mxu0 %v251
  %384 = vmatprep.subr.mxu0 %v256
  %385 = vmatpush1.msra.mxu0 %v255
  %386 = vmatprep.subr.mxu0 0.0
  %387 = vmatpush1.msra.mxu0 0.0
  %388 = vmatprep.subr.mxu0 0.0
  %389 = vmatpush1.msra.mxu0 0.0
  %390 = vmatprep.subr.mxu0 0.0
  %391 = vmatpush1.msra.mxu0 0.0
  %392 = vmatprep.subr.mxu0 0.0
  %393 = vmatpush1.msra.mxu0 0.0
  %394 = vmatprep.subr.mxu0 0.0
  %395 = vmatpush1.msra.mxu0 0.0
  %396 = vmatprep.subr.mxu0 0.0
  %397 = vmatpush1.msra.mxu0 0.0
  %398 = vmatprep.subr.mxu0 0.0
  %399 = vmatpush1.msra.mxu0 0.0
  %400 = vmatprep.subr.mxu0 0.0
  %401 = vmatpush1.msra.mxu0 0.0
  %402 = vmatprep.subr.mxu0 0.0
  %403 = vmatpush1.msra.mxu0 0.0
  %404 = vmatprep.subr.mxu0 0.0
  %405 = vmatpush1.msra.mxu0 0.0
  %406 = vmatprep.subr.mxu0 0.0
  %407 = vmatpush1.msra.mxu0 0.0
  %408 = vmatprep.subr.mxu0 0.0
  %409 = vmatpush1.msra.mxu0 0.0
  %410 = vmatprep.subr.mxu0 0.0
  %411 = vmatpush1.msra.mxu0 0.0
  %412 = vmatprep.subr.mxu0 0.0
  %413 = vmatpush1.msra.mxu0 0.0
  %414 = vmatprep.subr.mxu0 0.0
  %415 = vmatpush1.msra.mxu0 0.0
  %416 = vmatprep.subr.mxu0 0.0
  %417 = vmatpush1.msra.mxu0 0.0
  %418 = vmatprep.subr.mxu0 0.0
  %419 = vmatpush1.msra.mxu0 0.0
  %420 = vmatprep.subr.mxu0 0.0
  %421 = vmatpush1.msra.mxu0 0.0
  %422 = vmatprep.subr.mxu0 0.0
  %423 = vmatpush1.msra.mxu0 0.0
  %424 = vmatprep.subr.mxu0 0.0
  %425 = vmatpush1.msra.mxu0 0.0
  %426 = vmatprep.subr.mxu0 0.0
  %427 = vmatpush1.msra.mxu0 0.0
  %428 = vmatprep.subr.mxu0 0.0
  %429 = vmatpush1.msra.mxu0 0.0
  %430 = vmatprep.subr.mxu0 0.0
  %431 = vmatpush1.msra.mxu0 0.0
  %432 = vmatprep.subr.mxu0 0.0
  %433 = vmatpush1.msra.mxu0 0.0
  %434 = vmatprep.subr.mxu0 0.0
  %435 = vmatpush1.msra.mxu0 0.0
  %436 = vmatprep.subr.mxu0 0.0
  %437 = vmatpush1.msra.mxu0 0.0
  %438 = vmatprep.subr.mxu0 0.0
  %439 = vmatpush1.msra.mxu0 0.0
  %440 = vmatprep.subr.mxu0 0.0
  %441 = vmatpush1.msra.mxu0 0.0
  %442 = vmatprep.mubr.f32.mxu0 0.0
  %443 = vmatmul.mubr.f32.gmra.mrb[0].mxu0 %v281
  %v444 = vpop.f32.mrb[0].mxu0
  %v445 = vadd.f32 %v264, %v444
  %v446 = vpop.f32.mrb[0].mxu0
  %v447 = vadd.f32 %v264, %v446
  %448 = vmatprep.mubr.f32.mxu0 0.0
  %449 = vmatmul.mubr.f32.gmra.mrb[0].mxu0 %v283
  %v450 = vpop.f32.mrb[0].mxu0
  %v451 = vadd.f32 %v269, %v450
  %v452 = vpop.f32.mrb[0].mxu0
  %v453 = vadd.f32 %v269, %v452
  %454 = vmatprep.mubr.f32.mxu0 0.0
  %455 = vmatmul.mubr.f32.gmra.mrb[0].mxu0 %v285
  %v456 = vpop.f32.mrb[0].mxu0
  %v457 = vadd.f32 %v274, %v456
  %v458 = vpop.f32.mrb[0].mxu0
  %v459 = vadd.f32 %v274, %v458
  %460 = vmatprep.mubr.f32.mxu0 0.0
  %461 = vmatmul.mubr.f32.gmra.mrb[0].mxu0 %v287
  %v462 = vpop.f32.mrb[0].mxu0
  %v463 = vadd.f32 %v279, %v462
  %v464 = vpop.f32.mrb[0].mxu0
  %v465 = vadd.f32 %v279, %v464
  %466 = vdwg.mxu0
  %v467 = vmax.f32 %v356, 0.0
  %v468 = vmax.f32 %v358, 0.0
  %v469 = vmax.f32 %v445, 0.0
  %v470 = vmax.f32 %v447, 0.0
  %v471 = vmax.f32 %v362, 0.0
  %v472 = vmax.f32 %v364, 0.0
  %v473 = vmax.f32 %v451, 0.0
  %v474 = vmax.f32 %v453, 0.0
  %v475 = vmax.f32 %v368, 0.0
  %v476 = vmax.f32 %v370, 0.0
  %v477 = vmax.f32 %v457, 0.0
  %v478 = vmax.f32 %v459, 0.0
  %v479 = vmax.f32 %v374, 0.0
  %v480 = vmax.f32 %v376, 0.0
  %v481 = vmax.f32 %v463, 0.0
  %v482 = vmax.f32 %v465, 0.0
  %v483 = vld [vmem:[%s2 + $0x40] sm:$0xff]
  %v484 = vld [vmem:[%s2 + $0x48] sm:$0xff]
  %v485 = vld [vmem:[%s2 + $0x50] sm:$0xff]
  %v486 = vld [vmem:[%s2 + $0x58] sm:$0xff]
  %488 = vset.pattern.permute.xlu0 32
  %489 = vperm.xlu0 %488, %v483
  %v490 = vpop.permute.xlu0 %489
  %493 = vset.pattern.permute.xlu0 32
  %494 = vperm.xlu0 %493, %v484
  %v495 = vpop.permute.xlu0 %494
  %498 = vset.pattern.permute.xlu0 32
  %499 = vperm.xlu0 %498, %v485
  %v500 = vpop.permute.xlu0 %499
  %503 = vset.pattern.permute.xlu0 32
  %504 = vperm.xlu0 %503, %v486
  %v505 = vpop.permute.xlu0 %504
  %v507 = vsel %vm50, %v483, 0
  %v509 = vsel %vm50, %v484, 0
  %v511 = vsel %vm50, %v485, 0
  %v513 = vsel %vm50, %v486, 0
  %515 = vmatprep.subr.mxu0 %v468
  %516 = vmatpush1.msra.mxu0 %v467
  %517 = vmatprep.subr.mxu0 %v472
  %518 = vmatpush1.msra.mxu0 %v471
  %519 = vmatprep.subr.mxu0 %v476
  %520 = vmatpush1.msra.mxu0 %v475
  %521 = vmatprep.subr.mxu0 %v480
  %522 = vmatpush1.msra.mxu0 %v479
  %523 = vmatprep.subr.mxu0 0.0
  %524 = vmatpush1.msra.mxu0 0.0
  %525 = vmatprep.subr.mxu0 0.0
  %526 = vmatpush1.msra.mxu0 0.0
  %527 = vmatprep.subr.mxu0 0.0
  %528 = vmatpush1.msra.mxu0 0.0
  %529 = vmatprep.subr.mxu0 0.0
  %530 = vmatpush1.msra.mxu0 0.0
  %531 = vmatprep.subr.mxu0 0.0
  %532 = vmatpush1.msra.mxu0 0.0
  %533 = vmatprep.subr.mxu0 0.0
  %534 = vmatpush1.msra.mxu0 0.0
  %535 = vmatprep.subr.mxu0 0.0
  %536 = vmatpush1.msra.mxu0 0.0
  %537 = vmatprep.subr.mxu0 0.0
  %538 = vmatpush1.msra.mxu0 0.0
  %539 = vmatprep.subr.mxu0 0.0
  %540 = vmatpush1.msra.mxu0 0.0
  %541 = vmatprep.subr.mxu0 0.0
  %542 = vmatpush1.msra.mxu0 0.0
  %543 = vmatprep.subr.mxu0 0.0
  %544 = vmatpush1.msra.mxu0 0.0
  %545 = vmatprep.subr.mxu0 0.0
  %546 = vmatpush1.msra.mxu0 0.0
  %547 = vmatprep.subr.mxu0 0.0
  %548 = vmatpush1.msra.mxu0 0.0
  %549 = vmatprep.subr.mxu0 0.0
  %550 = vmatpush1.msra.mxu0 0.0
  %551 = vmatprep.subr.mxu0 0.0
  %552 = vmatpush1.msra.mxu0 0.0
  %553 = vmatprep.subr.mxu0 0.0
  %554 = vmatpush1.msra.mxu0 0.0
  %555 = vmatprep.subr.mxu0 0.0
  %556 = vmatpush1.msra.mxu0 0.0
  %557 = vmatprep.subr.mxu0 0.0
  %558 = vmatpush1.msra.mxu0 0.0
  %559 = vmatprep.subr.mxu0 0.0
  %560 = vmatpush1.msra.mxu0 0.0
  %561 = vmatprep.subr.mxu0 0.0
  %562 = vmatpush1.msra.mxu0 0.0
  %563 = vmatprep.subr.mxu0 0.0
  %564 = vmatpush1.msra.mxu0 0.0
  %565 = vmatprep.subr.mxu0 0.0
  %566 = vmatpush1.msra.mxu0 0.0
  %567 = vmatprep.subr.mxu0 0.0
  %568 = vmatpush1.msra.mxu0 0.0
  %569 = vmatprep.subr.mxu0 0.0
  %570 = vmatpush1.msra.mxu0 0.0
  %571 = vmatprep.subr.mxu0 0.0
  %572 = vmatpush1.msra.mxu0 0.0
  %573 = vmatprep.subr.mxu0 0.0
  %574 = vmatpush1.msra.mxu0 0.0
  %575 = vmatprep.subr.mxu0 0.0
  %576 = vmatpush1.msra.mxu0 0.0
  %577 = vmatprep.subr.mxu0 0.0
  %578 = vmatpush1.msra.mxu0 0.0
  %579 = vmatprep.mubr.f32.mxu0 0.0
  %580 = vmatmul.mubr.f32.gmra.mrb[0].mxu0 %v507
  %v581 = vpop.f32.mrb[0].mxu0
  %v582 = vadd.f32 %v490, %v581
  %v583 = vpop.f32.mrb[0].mxu0
  %v584 = vadd.f32 %v490, %v583
  %585 = vmatprep.mubr.f32.mxu0 0.0
  %586 = vmatmul.mubr.f32.gmra.mrb[0].mxu0 %v509
  %v587 = vpop.f32.mrb[0].mxu0
  %v588 = vadd.f32 %v495, %v587
  %v589 = vpop.f32.mrb[0].mxu0
  %v590 = vadd.f32 %v495, %v589
  %591 = vmatprep.mubr.f32.mxu0 0.0
  %592 = vmatmul.mubr.f32.gmra.mrb[0].mxu0 %v511
  %v593 = vpop.f32.mrb[0].mxu0
  %v594 = vadd.f32 %v500, %v593
  %v595 = vpop.f32.mrb[0].mxu0
  %v596 = vadd.f32 %v500, %v595
  %597 = vmatprep.mubr.f32.mxu0 0.0
  %598 = vmatmul.mubr.f32.gmra.mrb[0].mxu0 %v513
  %v599 = vpop.f32.mrb[0].mxu0
  %v600 = vadd.f32 %v505, %v599
  %v601 = vpop.f32.mrb[0].mxu0
  %v602 = vadd.f32 %v505, %v601
  %603 = vdwg.mxu0
  %604 = vmatprep.subr.mxu0 %v470
  %605 = vmatpush1.msra.mxu0 %v469
  %606 = vmatprep.subr.mxu0 %v474
  %607 = vmatpush1.msra.mxu0 %v473
  %608 = vmatprep.subr.mxu0 %v478
  %609 = vmatpush1.msra.mxu0 %v477
  %610 = vmatprep.subr.mxu0 %v482
  %611 = vmatpush1.msra.mxu0 %v481
  %612 = vmatprep.subr.mxu0 0.0
  %613 = vmatpush1.msra.mxu0 0.0
  %614 = vmatprep.subr.mxu0 0.0
  %615 = vmatpush1.msra.mxu0 0.0
  %616 = vmatprep.subr.mxu0 0.0
  %617 = vmatpush1.msra.mxu0 0.0
  %618 = vmatprep.subr.mxu0 0.0
  %619 = vmatpush1.msra.mxu0 0.0
  %620 = vmatprep.subr.mxu0 0.0
  %621 = vmatpush1.msra.mxu0 0.0
  %622 = vmatprep.subr.mxu0 0.0
  %623 = vmatpush1.msra.mxu0 0.0
  %624 = vmatprep.subr.mxu0 0.0
  %625 = vmatpush1.msra.mxu0 0.0
  %626 = vmatprep.subr.mxu0 0.0
  %627 = vmatpush1.msra.mxu0 0.0
  %628 = vmatprep.subr.mxu0 0.0
  %629 = vmatpush1.msra.mxu0 0.0
  %630 = vmatprep.subr.mxu0 0.0
  %631 = vmatpush1.msra.mxu0 0.0
  %632 = vmatprep.subr.mxu0 0.0
  %633 = vmatpush1.msra.mxu0 0.0
  %634 = vmatprep.subr.mxu0 0.0
  %635 = vmatpush1.msra.mxu0 0.0
  %636 = vmatprep.subr.mxu0 0.0
  %637 = vmatpush1.msra.mxu0 0.0
  %638 = vmatprep.subr.mxu0 0.0
  %639 = vmatpush1.msra.mxu0 0.0
  %640 = vmatprep.subr.mxu0 0.0
  %641 = vmatpush1.msra.mxu0 0.0
  %642 = vmatprep.subr.mxu0 0.0
  %643 = vmatpush1.msra.mxu0 0.0
  %644 = vmatprep.subr.mxu0 0.0
  %645 = vmatpush1.msra.mxu0 0.0
  %646 = vmatprep.subr.mxu0 0.0
  %647 = vmatpush1.msra.mxu0 0.0
  %648 = vmatprep.subr.mxu0 0.0
  %649 = vmatpush1.msra.mxu0 0.0
  %650 = vmatprep.subr.mxu0 0.0
  %651 = vmatpush1.msra.mxu0 0.0
  %652 = vmatprep.subr.mxu0 0.0
  %653 = vmatpush1.msra.mxu0 0.0
  %654 = vmatprep.subr.mxu0 0.0
  %655 = vmatpush1.msra.mxu0 0.0
  %656 = vmatprep.subr.mxu0 0.0
  %657 = vmatpush1.msra.mxu0 0.0
  %658 = vmatprep.subr.mxu0 0.0
  %659 = vmatpush1.msra.mxu0 0.0
  %660 = vmatprep.subr.mxu0 0.0
  %661 = vmatpush1.msra.mxu0 0.0
  %662 = vmatprep.subr.mxu0 0.0
  %663 = vmatpush1.msra.mxu0 0.0
  %664 = vmatprep.subr.mxu0 0.0
  %665 = vmatpush1.msra.mxu0 0.0
  %666 = vmatprep.subr.mxu0 0.0
  %667 = vmatpush1.msra.mxu0 0.0
  %668 = vmatprep.mubr.f32.mxu0 0.0
  %669 = vmatmul.mubr.f32.gmra.mrb[0].mxu0 %v507
  %v670 = vpop.f32.mrb[0].mxu0
  %v671 = vadd.f32 %v490, %v670
  %v672 = vpop.f32.mrb[0].mxu0
  %v673 = vadd.f32 %v490, %v672
  %674 = vmatprep.mubr.f32.mxu0 0.0
  %675 = vmatmul.mubr.f32.gmra.mrb[0].mxu0 %v509
  %v676 = vpop.f32.mrb[0].mxu0
  %v677 = vadd.f32 %v495, %v676
  %v678 = vpop.f32.mrb[0].mxu0
  %v679 = vadd.f32 %v495, %v678
  %680 = vmatprep.mubr.f32.mxu0 0.0
  %681 = vmatmul.mubr.f32.gmra.mrb[0].mxu0 %v511
  %v682 = vpop.f32.mrb[0].mxu0
  %v683 = vadd.f32 %v500, %v682
  %v684 = vpop.f32.mrb[0].mxu0
  %v685 = vadd.f32 %v500, %v684
  %686 = vmatprep.mubr.f32.mxu0 0.0
  %687 = vmatmul.mubr.f32.gmra.mrb[0].mxu0 %v513
  %v688 = vpop.f32.mrb[0].mxu0
  %v689 = vadd.f32 %v505, %v688
  %v690 = vpop.f32.mrb[0].mxu0
  %v691 = vadd.f32 %v505, %v690
  %692 = vdwg.mxu0
  %v693 = vmax.f32 %v582, 0.0
  %v694 = vmax.f32 %v584, 0.0
  %v695 = vmax.f32 %v671, 0.0
  %v696 = vmax.f32 %v673, 0.0
  %v697 = vmax.f32 %v588, 0.0
  %v698 = vmax.f32 %v590, 0.0
  %v699 = vmax.f32 %v677, 0.0
  %v700 = vmax.f32 %v679, 0.0
  %v701 = vmax.f32 %v594, 0.0
  %v702 = vmax.f32 %v596, 0.0
  %v703 = vmax.f32 %v683, 0.0
  %v704 = vmax.f32 %v685, 0.0
  %v705 = vmax.f32 %v600, 0.0
  %v706 = vmax.f32 %v602, 0.0
  %v707 = vmax.f32 %v689, 0.0
  %v708 = vmax.f32 %v691, 0.0
  %v709 = vld [vmem:[%s2 + $0x60] sm:$0xf]
  %711 = vset.pattern.permute.xlu0 32
  %712 = vperm.xlu0 %711, %v709
  %v713 = vpop.permute.xlu0 %712
  %v715 = vsel %vm50, %v709, 0
  %717 = vmatprep.subr.mxu0 %v694
  %718 = vmatpush1.msra.mxu0 %v693
  %719 = vmatprep.subr.mxu0 %v698
  %720 = vmatpush1.msra.mxu0 %v697
  %721 = vmatprep.subr.mxu0 %v702
  %722 = vmatpush1.msra.mxu0 %v701
  %723 = vmatprep.subr.mxu0 %v706
  %724 = vmatpush1.msra.mxu0 %v705
  %725 = vmatprep.subr.mxu0 0.0
  %726 = vmatpush1.msra.mxu0 0.0
  %727 = vmatprep.subr.mxu0 0.0
  %728 = vmatpush1.msra.mxu0 0.0
  %729 = vmatprep.subr.mxu0 0.0
  %730 = vmatpush1.msra.mxu0 0.0
  %731 = vmatprep.subr.mxu0 0.0
  %732 = vmatpush1.msra.mxu0 0.0
  %733 = vmatprep.subr.mxu0 0.0
  %734 = vmatpush1.msra.mxu0 0.0
  %735 = vmatprep.subr.mxu0 0.0
  %736 = vmatpush1.msra.mxu0 0.0
  %737 = vmatprep.subr.mxu0 0.0
  %738 = vmatpush1.msra.mxu0 0.0
  %739 = vmatprep.subr.mxu0 0.0
  %740 = vmatpush1.msra.mxu0 0.0
  %741 = vmatprep.subr.mxu0 0.0
  %742 = vmatpush1.msra.mxu0 0.0
  %743 = vmatprep.subr.mxu0 0.0
  %744 = vmatpush1.msra.mxu0 0.0
  %745 = vmatprep.subr.mxu0 0.0
  %746 = vmatpush1.msra.mxu0 0.0
  %747 = vmatprep.subr.mxu0 0.0
  %748 = vmatpush1.msra.mxu0 0.0
  %749 = vmatprep.subr.mxu0 0.0
  %750 = vmatpush1.msra.mxu0 0.0
  %751 = vmatprep.subr.mxu0 0.0
  %752 = vmatpush1.msra.mxu0 0.0
  %753 = vmatprep.subr.mxu0 0.0
  %754 = vmatpush1.msra.mxu0 0.0
  %755 = vmatprep.subr.mxu0 0.0
  %756 = vmatpush1.msra.mxu0 0.0
  %757 = vmatprep.subr.mxu0 0.0
  %758 = vmatpush1.msra.mxu0 0.0
  %759 = vmatprep.subr.mxu0 0.0
  %760 = vmatpush1.msra.mxu0 0.0
  %761 = vmatprep.subr.mxu0 0.0
  %762 = vmatpush1.msra.mxu0 0.0
  %763 = vmatprep.subr.mxu0 0.0
  %764 = vmatpush1.msra.mxu0 0.0
  %765 = vmatprep.subr.mxu0 0.0
  %766 = vmatpush1.msra.mxu0 0.0
  %767 = vmatprep.subr.mxu0 0.0
  %768 = vmatpush1.msra.mxu0 0.0
  %769 = vmatprep.subr.mxu0 0.0
  %770 = vmatpush1.msra.mxu0 0.0
  %771 = vmatprep.subr.mxu0 0.0
  %772 = vmatpush1.msra.mxu0 0.0
  %773 = vmatprep.subr.mxu0 0.0
  %774 = vmatpush1.msra.mxu0 0.0
  %775 = vmatprep.subr.mxu0 0.0
  %776 = vmatpush1.msra.mxu0 0.0
  %777 = vmatprep.subr.mxu0 0.0
  %778 = vmatpush1.msra.mxu0 0.0
  %779 = vmatprep.subr.mxu0 0.0
  %780 = vmatpush1.msra.mxu0 0.0
  %781 = vmatprep.mubr.f32.mxu0 0.0
  %782 = vmatmul.mubr.f32.gmra.mrb[0].mxu0 %v715
  %v783 = vpop.f32.mrb[0].mxu0
  %v784 = vadd.f32 %v713, %v783
  %v785 = vpop.f32.mrb[0].mxu0
  %v786 = vadd.f32 %v713, %v785
  %787 = vdwg.mxu0
  %788 = vmatprep.subr.mxu0 %v696
  %789 = vmatpush1.msra.mxu0 %v695
  %790 = vmatprep.subr.mxu0 %v700
  %791 = vmatpush1.msra.mxu0 %v699
  %792 = vmatprep.subr.mxu0 %v704
  %793 = vmatpush1.msra.mxu0 %v703
  %794 = vmatprep.subr.mxu0 %v708
  %795 = vmatpush1.msra.mxu0 %v707
  %796 = vmatprep.subr.mxu0 0.0
  %797 = vmatpush1.msra.mxu0 0.0
  %798 = vmatprep.subr.mxu0 0.0
  %799 = vmatpush1.msra.mxu0 0.0
  %800 = vmatprep.subr.mxu0 0.0
  %801 = vmatpush1.msra.mxu0 0.0
  %802 = vmatprep.subr.mxu0 0.0
  %803 = vmatpush1.msra.mxu0 0.0
  %804 = vmatprep.subr.mxu0 0.0
  %805 = vmatpush1.msra.mxu0 0.0
  %806 = vmatprep.subr.mxu0 0.0
  %807 = vmatpush1.msra.mxu0 0.0
  %808 = vmatprep.subr.mxu0 0.0
  %809 = vmatpush1.msra.mxu0 0.0
  %810 = vmatprep.subr.mxu0 0.0
  %811 = vmatpush1.msra.mxu0 0.0
  %812 = vmatprep.subr.mxu0 0.0
  %813 = vmatpush1.msra.mxu0 0.0
  %814 = vmatprep.subr.mxu0 0.0
  %815 = vmatpush1.msra.mxu0 0.0
  %816 = vmatprep.subr.mxu0 0.0
  %817 = vmatpush1.msra.mxu0 0.0
  %818 = vmatprep.subr.mxu0 0.0
  %819 = vmatpush1.msra.mxu0 0.0
  %820 = vmatprep.subr.mxu0 0.0
  %821 = vmatpush1.msra.mxu0 0.0
  %822 = vmatprep.subr.mxu0 0.0
  %823 = vmatpush1.msra.mxu0 0.0
  %824 = vmatprep.subr.mxu0 0.0
  %825 = vmatpush1.msra.mxu0 0.0
  %826 = vmatprep.subr.mxu0 0.0
  %827 = vmatpush1.msra.mxu0 0.0
  %828 = vmatprep.subr.mxu0 0.0
  %829 = vmatpush1.msra.mxu0 0.0
  %830 = vmatprep.subr.mxu0 0.0
  %831 = vmatpush1.msra.mxu0 0.0
  %832 = vmatprep.subr.mxu0 0.0
  %833 = vmatpush1.msra.mxu0 0.0
  %834 = vmatprep.subr.mxu0 0.0
  %835 = vmatpush1.msra.mxu0 0.0
  %836 = vmatprep.subr.mxu0 0.0
  %837 = vmatpush1.msra.mxu0 0.0
  %838 = vmatprep.subr.mxu0 0.0
  %839 = vmatpush1.msra.mxu0 0.0
  %840 = vmatprep.subr.mxu0 0.0
  %841 = vmatpush1.msra.mxu0 0.0
  %842 = vmatprep.subr.mxu0 0.0
  %843 = vmatpush1.msra.mxu0 0.0
  %844 = vmatprep.subr.mxu0 0.0
  %845 = vmatpush1.msra.mxu0 0.0
  %846 = vmatprep.subr.mxu0 0.0
  %847 = vmatpush1.msra.mxu0 0.0
  %848 = vmatprep.subr.mxu0 0.0
  %849 = vmatpush1.msra.mxu0 0.0
  %850 = vmatprep.subr.mxu0 0.0
  %851 = vmatpush1.msra.mxu0 0.0
  %852 = vmatprep.mubr.f32.mxu0 0.0
  %853 = vmatmul.mubr.f32.gmra.mrb[0].mxu0 %v715
  %v854 = vpop.f32.mrb[0].mxu0
  %v855 = vadd.f32 %v713, %v854
  %v856 = vpop.f32.mrb[0].mxu0
  %v857 = vadd.f32 %v713, %v856
  %858 = vdwg.mxu0
  %v859 = vxor.u32 %v784, 2147483648
  %v860 = vxor.u32 %v786, 2147483648
  %v861 = vxor.u32 %v855, 2147483648
  %v862 = vxor.u32 %v857, 2147483648
  %v863 = vmul.f32 %v859, 1.442695
  %v864 = vpow.pop %v863
  %v865 = vmul.f32 %v860, 1.442695
  %v866 = vpow.pop %v865
  %v867 = vmul.f32 %v861, 1.442695
  %v868 = vpow.pop %v867
  %v869 = vmul.f32 %v862, 1.442695
  %v870 = vpow.pop %v869
  %v871 = vadd.f32 %v864, 1.0
  %v872 = vadd.f32 %v866, 1.0
  %v873 = vadd.f32 %v868, 1.0
  %v874 = vadd.f32 %v870, 1.0
  %v875 = vrcp.pop %v871
  %v876 = vmul.f32 1.0, %v875
  %v877 = vrcp.pop %v872
  %v878 = vmul.f32 1.0, %v877
  %v879 = vrcp.pop %v873
  %v880 = vmul.f32 1.0, %v879
  %v881 = vrcp.pop %v874
  %v882 = vmul.f32 1.0, %v881
  %v887 = vcombine.low %v876, %v878
  %v888 = vcombine.low %v880, %v882
  %891 = vst [vmem:[%s3] sm:$0xff] %v887
  %892 = vst [vmem:[%s3 + $0x8] sm:$0xff] %v888
  // Predicated region
  $region14: #{fcomb_forward.1} parent=0 // pred_check
    _
  $region15: #{fcomb_forward.1} parent=0 // pred_check_branch
    %894 = sbr.rel (0) target = $region17
  $region16: #{fcomb_forward.1} parent=0 // pred_region
    _
  $region17: #{fcomb_forward.1} parent=0 // pred_fallthru
    _
  // Predicated region
  $region18: #{fcomb_forward.1} parent=0 // pred_check
    _
  $region19: #{fcomb_forward.1} parent=0 // pred_check_branch
    %896 = sbr.rel (0) target = $region21
  $region20: #{fcomb_forward.1} parent=0 // pred_region
    _
  $region21: #{fcomb_forward.1} parent=0 // pred_fallthru
    _

</llo_original>
